<compile_context>
chip_gen: v5e
topology: v5e:2x2
jax: 0.10.0
libtpu: 0.0.40
codegen_flags: <defaults>
</compile_context>

<pallas_src>
import math
import functools

import jax
import jax.numpy as jnp
from jax.experimental import pallas as pl
from jax.experimental.pallas import tpu as pltpu


def causal_attn_kernel(x_ref, wq_ref, wk_ref, wv_ref, bq_ref, bk_ref, bv_ref,
                       wp_ref, bp_ref, o_ref, *, n_heads: int):
    B, T, C = x_ref.shape
    D = C // n_heads
    scale = 1.0 / math.sqrt(D)

    # (B, T, C) -> (B*T, C): merging leading dims is a layout no-op.
    x2d = x_ref[...].reshape(B * T, C)
    xb = x2d.astype(jnp.bfloat16)                      # bf16 MXU operand, f32 acc

    # Causal mask, shared across batch and heads.
    row = jax.lax.broadcasted_iota(jnp.int32, (T, T), 0)
    col = jax.lax.broadcasted_iota(jnp.int32, (T, T), 1)
    causal = (row >= col)[None]                        # (1, T, T)

    # f32 accumulator for the output projection; bias added once here (hoisted
    # broadcast, not re-emitted per head).
    acc = jnp.broadcast_to(bp_ref[...], (B * T, C)).astype(jnp.float32)

    for h in range(n_heads):
        # Leading-dim (static) indexing of per-head weights: no lane slicing.
        wq_h = wq_ref[h].astype(jnp.bfloat16)          # (C, D)
        wk_h = wk_ref[h].astype(jnp.bfloat16)
        wv_h = wv_ref[h].astype(jnp.bfloat16)

        q = jnp.dot(xb, wq_h, preferred_element_type=jnp.float32) + bq_ref[h]  # (B*T, D)
        k = jnp.dot(xb, wk_h, preferred_element_type=jnp.float32) + bk_ref[h]
        v = jnp.dot(xb, wv_h, preferred_element_type=jnp.float32) + bv_ref[h]

        q = q * scale                                  # fold 1/sqrt(D) into q

        q3 = q.reshape(B, T, D).astype(jnp.bfloat16)   # split leading dim only
        k3 = k.reshape(B, T, D).astype(jnp.bfloat16)
        v3 = v.reshape(B, T, D).astype(jnp.bfloat16)

        # Batched (over B) attention scores for this head.
        att = jnp.einsum('btd,bsd->bts', q3, k3,
                         preferred_element_type=jnp.float32)        # (B, T, T) f32
        # -inf is safe: every query row has at least the diagonal unmasked.
        att = jnp.where(causal, att, -jnp.inf)
        att = att - jnp.max(att, axis=-1, keepdims=True)
        att = jnp.exp(att)
        att = att * pl.reciprocal(jnp.sum(att, axis=-1, keepdims=True), approx=True)

        yh = jnp.einsum('bts,bsd->btd', att.astype(jnp.bfloat16), v3,
                        preferred_element_type=jnp.float32)         # (B, T, D)

        # Fold the head concat into the output projection: accumulate on MXU.
        acc = acc + jnp.dot(yh.reshape(B * T, D).astype(jnp.bfloat16),
                            wp_ref[h].astype(jnp.bfloat16),
                            preferred_element_type=jnp.float32)     # (B*T, C)

    o_ref[...] = acc.reshape(B, T, C).astype(o_ref.dtype)


@functools.partial(jax.jit, static_argnames=("n_heads",))
def causal_self_attention(x, w_attn, b_attn, w_proj, b_proj, *, n_heads):
    """x: (B, T, C); w_attn: (C, 3C); b_attn: (3C,); w_proj: (C, C); b_proj: (C,)."""
    B, T, C = x.shape
    assert C % n_heads == 0
    D = C // n_heads

    # Wrapper-side layout plumbing (cheap, outside the kernel):
    # fused QKV weight -> per-head (H, C, D) slabs; biases -> (H, 1, D).
    wq, wk, wv = jnp.split(w_attn, 3, axis=1)                       # each (C, C)
    per_head_w = lambda w: w.reshape(C, n_heads, D).transpose(1, 0, 2)
    wq_h, wk_h, wv_h = per_head_w(wq), per_head_w(wk), per_head_w(wv)
    bq, bk, bv = jnp.split(b_attn, 3)                               # each (C,)
    per_head_b = lambda b: b.reshape(n_heads, 1, D)
    bq_h, bk_h, bv_h = per_head_b(bq), per_head_b(bk), per_head_b(bv)
    wp_h = w_proj.reshape(n_heads, D, C)                            # rows h*D:(h+1)*D
    bp_2d = b_proj.reshape(1, C)

    kernel = functools.partial(causal_attn_kernel, n_heads=n_heads)
    vmem = pl.BlockSpec(memory_space=pltpu.MemorySpace.VMEM)
    return pl.pallas_call(
        kernel,
        out_shape=jax.ShapeDtypeStruct((B, T, C), x.dtype),
        in_specs=[vmem] * 9,
        out_specs=vmem,
    )(x, wq_h, wk_h, wv_h, bq_h, bk_h, bv_h, wp_h, bp_2d)


def reference_attention(x, w_attn, b_attn, w_proj, b_proj, n_heads):
    """Pure-JAX f32 reference mirroring the PyTorch forward (eval mode)."""
    B, T, C = x.shape
    D = C // n_heads
    qkv = x @ w_attn + b_attn                          # (B, T, 3C)
    q, k, v = jnp.split(qkv, 3, axis=-1)
    heads = lambda t: t.reshape(B, T, n_heads, D).transpose(0, 2, 1, 3)
    q, k, v = heads(q), heads(k), heads(v)
    att = (q @ k.transpose(0, 1, 3, 2)) * (1.0 / math.sqrt(D))
    mask = jnp.tril(jnp.ones((T, T), bool))
    att = jnp.where(mask[None, None], att, -jnp.inf)
    att = jax.nn.softmax(att, axis=-1)
    y = att @ v                                        # (B, H, T, D)
    y = y.transpose(0, 2, 1, 3).reshape(B, T, C)
    return y @ w_proj + b_proj


if __name__ == "__main__":
    # Small config consistent with the module: n_embd=32, n_heads=4, seq=8, batch=2.
    B, T, C, H = 2, 8, 32, 4

    key = jax.random.PRNGKey(0)
    kx, k1, k2, k3, k4 = jax.random.split(key, 5)

    x = jax.random.normal(kx, (B, T, C), dtype=jnp.float32)
    # Deterministic parameter init (nn.Linear-like uniform scaling, fan_in=C).
    bound = 1.0 / math.sqrt(C)
    w_attn = jax.random.uniform(k1, (C, 3 * C), jnp.float32, -bound, bound)
    b_attn = jax.random.uniform(k2, (3 * C,), jnp.float32, -bound, bound)
    w_proj = jax.random.uniform(k3, (C, C), jnp.float32, -bound, bound)
    b_proj = jax.random.uniform(k4, (C,), jnp.float32, -bound, bound)

    out = causal_self_attention(x, w_attn, b_attn, w_proj, b_proj, n_heads=H)
    out = jax.block_until_ready(out)

    ref = reference_attention(x, w_attn, b_attn, w_proj, b_proj, H)
    assert out.shape == (B, T, C)
    # bf16 MXU operands + approx reciprocal -> relaxed (but tight for bf16) tolerance.
    assert jnp.allclose(out, ref, atol=2e-2, rtol=2e-2), "mismatch vs reference"

    print("KERNEL_OK")
</pallas_src>

<mosaic_0001>
module attributes {stable_mosaic.version = 11 : i64} {
  func.func @causal_attn_kernel(%arg0: memref<2x8x32xf32, #tpu.memory_space<vmem>>, %arg1: memref<4x32x8xf32, #tpu.memory_space<vmem>>, %arg2: memref<4x32x8xf32, #tpu.memory_space<vmem>>, %arg3: memref<4x32x8xf32, #tpu.memory_space<vmem>>, %arg4: memref<4x1x8xf32, #tpu.memory_space<vmem>>, %arg5: memref<4x1x8xf32, #tpu.memory_space<vmem>>, %arg6: memref<4x1x8xf32, #tpu.memory_space<vmem>>, %arg7: memref<4x8x32xf32, #tpu.memory_space<vmem>>, %arg8: memref<1x32xf32, #tpu.memory_space<vmem>>, %arg9: memref<2x8x32xf32, #tpu.memory_space<vmem>>) attributes {dimension_semantics = [], scalar_prefetch = 0 : i64, scratch_operands = 0 : i64, tpu.core_type = #tpu.core_type<tc>} {
    %c0 = arith.constant 0 : index
    %c0_0 = arith.constant 0 : index
    %c0_1 = arith.constant 0 : index
    %0 = vector.load %arg0[%c0, %c0_0, %c0_1] : memref<2x8x32xf32, #tpu.memory_space<vmem>>, vector<2x8x32xf32>
    %1 = vector.shape_cast %0 : vector<2x8x32xf32> to vector<16x32xf32>
    %2 = arith.truncf %1 : vector<16x32xf32> to vector<16x32xbf16>
    %3 = tpu.iota {dimensions = array<i32: 0>} : vector<8x8xi32>
    %4 = tpu.iota {dimensions = array<i32: 1>} : vector<8x8xi32>
    %5 = arith.cmpi sge, %3, %4 : vector<8x8xi32>
    %6 = vector.shape_cast %5 : vector<8x8xi1> to vector<1x8x8xi1>
    %c0_2 = arith.constant 0 : index
    %c0_3 = arith.constant 0 : index
    %7 = vector.load %arg8[%c0_2, %c0_3] : memref<1x32xf32, #tpu.memory_space<vmem>>, vector<1x32xf32>
    %8 = vector.shape_cast %7 : vector<1x32xf32> to vector<1x32xf32>
    %9 = vector.broadcast %8 : vector<1x32xf32> to vector<16x32xf32>
    %c0_4 = arith.constant 0 : index
    %c0_5 = arith.constant 0 : index
    %c0_6 = arith.constant 0 : index
    %10 = vector.load %arg1[%c0_4, %c0_5, %c0_6] : memref<4x32x8xf32, #tpu.memory_space<vmem>>, vector<1x32x8xf32>
    %11 = vector.shape_cast %10 : vector<1x32x8xf32> to vector<32x8xf32>
    %12 = arith.truncf %11 : vector<32x8xf32> to vector<32x8xbf16>
    %c0_7 = arith.constant 0 : index
    %c0_8 = arith.constant 0 : index
    %c0_9 = arith.constant 0 : index
    %13 = vector.load %arg2[%c0_7, %c0_8, %c0_9] : memref<4x32x8xf32, #tpu.memory_space<vmem>>, vector<1x32x8xf32>
    %14 = vector.shape_cast %13 : vector<1x32x8xf32> to vector<32x8xf32>
    %15 = arith.truncf %14 : vector<32x8xf32> to vector<32x8xbf16>
    %c0_10 = arith.constant 0 : index
    %c0_11 = arith.constant 0 : index
    %c0_12 = arith.constant 0 : index
    %16 = vector.load %arg3[%c0_10, %c0_11, %c0_12] : memref<4x32x8xf32, #tpu.memory_space<vmem>>, vector<1x32x8xf32>
    %17 = vector.shape_cast %16 : vector<1x32x8xf32> to vector<32x8xf32>
    %18 = arith.truncf %17 : vector<32x8xf32> to vector<32x8xbf16>
    %cst = arith.constant dense<0.000000e+00> : vector<16x8xf32>
    %19 = tpu.matmul %2, %12, %cst {dimension_numbers = #tpu.dot_dimension_numbers<[1], [0], [0], [1], [0, 0, 1, 1], [], []>} : vector<16x32xbf16>, vector<32x8xbf16>, vector<16x8xf32> -> vector<16x8xf32>
    %c0_13 = arith.constant 0 : index
    %c0_14 = arith.constant 0 : index
    %c0_15 = arith.constant 0 : index
    %20 = vector.load %arg4[%c0_13, %c0_14, %c0_15] : memref<4x1x8xf32, #tpu.memory_space<vmem>>, vector<1x1x8xf32>
    %21 = vector.shape_cast %20 : vector<1x1x8xf32> to vector<1x8xf32>
    %22 = vector.broadcast %21 : vector<1x8xf32> to vector<16x8xf32>
    %23 = arith.addf %19, %22 : vector<16x8xf32>
    %cst_16 = arith.constant dense<0.000000e+00> : vector<16x8xf32>
    %24 = tpu.matmul %2, %15, %cst_16 {dimension_numbers = #tpu.dot_dimension_numbers<[1], [0], [0], [1], [0, 0, 1, 1], [], []>} : vector<16x32xbf16>, vector<32x8xbf16>, vector<16x8xf32> -> vector<16x8xf32>
    %c0_17 = arith.constant 0 : index
    %c0_18 = arith.constant 0 : index
    %c0_19 = arith.constant 0 : index
    %25 = vector.load %arg5[%c0_17, %c0_18, %c0_19] : memref<4x1x8xf32, #tpu.memory_space<vmem>>, vector<1x1x8xf32>
    %26 = vector.shape_cast %25 : vector<1x1x8xf32> to vector<1x8xf32>
    %27 = vector.broadcast %26 : vector<1x8xf32> to vector<16x8xf32>
    %28 = arith.addf %24, %27 : vector<16x8xf32>
    %cst_20 = arith.constant dense<0.000000e+00> : vector<16x8xf32>
    %29 = tpu.matmul %2, %18, %cst_20 {dimension_numbers = #tpu.dot_dimension_numbers<[1], [0], [0], [1], [0, 0, 1, 1], [], []>} : vector<16x32xbf16>, vector<32x8xbf16>, vector<16x8xf32> -> vector<16x8xf32>
    %c0_21 = arith.constant 0 : index
    %c0_22 = arith.constant 0 : index
    %c0_23 = arith.constant 0 : index
    %30 = vector.load %arg6[%c0_21, %c0_22, %c0_23] : memref<4x1x8xf32, #tpu.memory_space<vmem>>, vector<1x1x8xf32>
    %31 = vector.shape_cast %30 : vector<1x1x8xf32> to vector<1x8xf32>
    %32 = vector.broadcast %31 : vector<1x8xf32> to vector<16x8xf32>
    %33 = arith.addf %29, %32 : vector<16x8xf32>
    %cst_24 = arith.constant 0.353553385 : f32
    %34 = vector.broadcast %cst_24 : f32 to vector<16x8xf32>
    %35 = arith.mulf %23, %34 : vector<16x8xf32>
    %36 = vector.shape_cast %35 : vector<16x8xf32> to vector<2x8x8xf32>
    %37 = arith.truncf %36 : vector<2x8x8xf32> to vector<2x8x8xbf16>
    %38 = vector.shape_cast %28 : vector<16x8xf32> to vector<2x8x8xf32>
    %39 = arith.truncf %38 : vector<2x8x8xf32> to vector<2x8x8xbf16>
    %40 = vector.shape_cast %33 : vector<16x8xf32> to vector<2x8x8xf32>
    %41 = arith.truncf %40 : vector<2x8x8xf32> to vector<2x8x8xbf16>
    "tpu.trace_start"() <{level = 10 : i32, message = "btd,bsd->bts"}> : () -> ()
    %cst_25 = arith.constant dense<0.000000e+00> : vector<2x8x8xf32>
    %42 = tpu.matmul %37, %39, %cst_25 {dimension_numbers = #tpu.dot_dimension_numbers<[2], [2], [1], [1], [0, 0, 0, 1, 1, 1], [0], [0]>} : vector<2x8x8xbf16>, vector<2x8x8xbf16>, vector<2x8x8xf32> -> vector<2x8x8xf32>
    %cst_26 = arith.constant 0xFF800000 : f32
    "tpu.trace_stop"() : () -> ()
    %43 = vector.shape_cast %6 : vector<1x8x8xi1> to vector<1x8x8xi1>
    %44 = vector.broadcast %43 : vector<1x8x8xi1> to vector<2x8x8xi1>
    %45 = vector.broadcast %cst_26 : f32 to vector<2x8x8xf32>
    %46 = arith.select %44, %42, %45 : vector<2x8x8xi1>, vector<2x8x8xf32>
    %cst_27 = arith.constant dense<0xFF800000> : vector<2x8xf32>
    %47 = vector.multi_reduction <maximumf>, %46, %cst_27 [2] : vector<2x8x8xf32> to vector<2x8xf32>
    %48 = vector.shape_cast %47 : vector<2x8xf32> to vector<2x8x1xf32>
    %49 = vector.broadcast %48 : vector<2x8x1xf32> to vector<2x8x8xf32>
    %50 = arith.subf %46, %49 : vector<2x8x8xf32>
    %51 = math.exp %50 : vector<2x8x8xf32>
    %cst_28 = arith.constant dense<0.000000e+00> : vector<2x8xf32>
    %52 = vector.multi_reduction <add>, %51, %cst_28 [2] : vector<2x8x8xf32> to vector<2x8xf32>
    %53 = vector.shape_cast %52 : vector<2x8xf32> to vector<2x8x1xf32>
    %54 = tpu.reciprocal %53 {approx = true} : vector<2x8x1xf32> -> vector<2x8x1xf32>
    %55 = vector.broadcast %54 : vector<2x8x1xf32> to vector<2x8x8xf32>
    %56 = arith.mulf %51, %55 : vector<2x8x8xf32>
    %57 = arith.truncf %56 : vector<2x8x8xf32> to vector<2x8x8xbf16>
    "tpu.trace_start"() <{level = 10 : i32, message = "bts,bsd->btd"}> : () -> ()
    %cst_29 = arith.constant dense<0.000000e+00> : vector<2x8x8xf32>
    %58 = tpu.matmul %57, %41, %cst_29 {dimension_numbers = #tpu.dot_dimension_numbers<[2], [1], [1], [2], [0, 0, 0, 1, 1, 2], [0], [0]>} : vector<2x8x8xbf16>, vector<2x8x8xbf16>, vector<2x8x8xf32> -> vector<2x8x8xf32>
    "tpu.trace_stop"() : () -> ()
    %59 = vector.shape_cast %58 : vector<2x8x8xf32> to vector<16x8xf32>
    %60 = arith.truncf %59 : vector<16x8xf32> to vector<16x8xbf16>
    %c0_30 = arith.constant 0 : index
    %c0_31 = arith.constant 0 : index
    %c0_32 = arith.constant 0 : index
    %61 = vector.load %arg7[%c0_30, %c0_31, %c0_32] : memref<4x8x32xf32, #tpu.memory_space<vmem>>, vector<1x8x32xf32>
    %62 = vector.shape_cast %61 : vector<1x8x32xf32> to vector<8x32xf32>
    %63 = arith.truncf %62 : vector<8x32xf32> to vector<8x32xbf16>
    %cst_33 = arith.constant dense<0.000000e+00> : vector<16x32xf32>
    %64 = tpu.matmul %60, %63, %cst_33 {dimension_numbers = #tpu.dot_dimension_numbers<[1], [0], [0], [1], [0, 0, 1, 1], [], []>} : vector<16x8xbf16>, vector<8x32xbf16>, vector<16x32xf32> -> vector<16x32xf32>
    %65 = arith.addf %9, %64 : vector<16x32xf32>
    %c1 = arith.constant 1 : index
    %c0_34 = arith.constant 0 : index
    %c0_35 = arith.constant 0 : index
    %66 = vector.load %arg1[%c1, %c0_34, %c0_35] : memref<4x32x8xf32, #tpu.memory_space<vmem>>, vector<1x32x8xf32>
    %67 = vector.shape_cast %66 : vector<1x32x8xf32> to vector<32x8xf32>
    %68 = arith.truncf %67 : vector<32x8xf32> to vector<32x8xbf16>
    %c1_36 = arith.constant 1 : index
    %c0_37 = arith.constant 0 : index
    %c0_38 = arith.constant 0 : index
    %69 = vector.load %arg2[%c1_36, %c0_37, %c0_38] : memref<4x32x8xf32, #tpu.memory_space<vmem>>, vector<1x32x8xf32>
    %70 = vector.shape_cast %69 : vector<1x32x8xf32> to vector<32x8xf32>
    %71 = arith.truncf %70 : vector<32x8xf32> to vector<32x8xbf16>
    %c1_39 = arith.constant 1 : index
    %c0_40 = arith.constant 0 : index
    %c0_41 = arith.constant 0 : index
    %72 = vector.load %arg3[%c1_39, %c0_40, %c0_41] : memref<4x32x8xf32, #tpu.memory_space<vmem>>, vector<1x32x8xf32>
    %73 = vector.shape_cast %72 : vector<1x32x8xf32> to vector<32x8xf32>
    %74 = arith.truncf %73 : vector<32x8xf32> to vector<32x8xbf16>
    %cst_42 = arith.constant dense<0.000000e+00> : vector<16x8xf32>
    %75 = tpu.matmul %2, %68, %cst_42 {dimension_numbers = #tpu.dot_dimension_numbers<[1], [0], [0], [1], [0, 0, 1, 1], [], []>} : vector<16x32xbf16>, vector<32x8xbf16>, vector<16x8xf32> -> vector<16x8xf32>
    %c1_43 = arith.constant 1 : index
    %c0_44 = arith.constant 0 : index
    %c0_45 = arith.constant 0 : index
    %76 = vector.load %arg4[%c1_43, %c0_44, %c0_45] : memref<4x1x8xf32, #tpu.memory_space<vmem>>, vector<1x1x8xf32>
    %77 = vector.shape_cast %76 : vector<1x1x8xf32> to vector<1x8xf32>
    %78 = vector.broadcast %77 : vector<1x8xf32> to vector<16x8xf32>
    %79 = arith.addf %75, %78 : vector<16x8xf32>
    %cst_46 = arith.constant dense<0.000000e+00> : vector<16x8xf32>
    %80 = tpu.matmul %2, %71, %cst_46 {dimension_numbers = #tpu.dot_dimension_numbers<[1], [0], [0], [1], [0, 0, 1, 1], [], []>} : vector<16x32xbf16>, vector<32x8xbf16>, vector<16x8xf32> -> vector<16x8xf32>
    %c1_47 = arith.constant 1 : index
    %c0_48 = arith.constant 0 : index
    %c0_49 = arith.constant 0 : index
    %81 = vector.load %arg5[%c1_47, %c0_48, %c0_49] : memref<4x1x8xf32, #tpu.memory_space<vmem>>, vector<1x1x8xf32>
    %82 = vector.shape_cast %81 : vector<1x1x8xf32> to vector<1x8xf32>
    %83 = vector.broadcast %82 : vector<1x8xf32> to vector<16x8xf32>
    %84 = arith.addf %80, %83 : vector<16x8xf32>
    %cst_50 = arith.constant dense<0.000000e+00> : vector<16x8xf32>
    %85 = tpu.matmul %2, %74, %cst_50 {dimension_numbers = #tpu.dot_dimension_numbers<[1], [0], [0], [1], [0, 0, 1, 1], [], []>} : vector<16x32xbf16>, vector<32x8xbf16>, vector<16x8xf32> -> vector<16x8xf32>
    %c1_51 = arith.constant 1 : index
    %c0_52 = arith.constant 0 : index
    %c0_53 = arith.constant 0 : index
    %86 = vector.load %arg6[%c1_51, %c0_52, %c0_53] : memref<4x1x8xf32, #tpu.memory_space<vmem>>, vector<1x1x8xf32>
    %87 = vector.shape_cast %86 : vector<1x1x8xf32> to vector<1x8xf32>
    %88 = vector.broadcast %87 : vector<1x8xf32> to vector<16x8xf32>
    %89 = arith.addf %85, %88 : vector<16x8xf32>
    %cst_54 = arith.constant 0.353553385 : f32
    %90 = vector.broadcast %cst_54 : f32 to vector<16x8xf32>
    %91 = arith.mulf %79, %90 : vector<16x8xf32>
    %92 = vector.shape_cast %91 : vector<16x8xf32> to vector<2x8x8xf32>
    %93 = arith.truncf %92 : vector<2x8x8xf32> to vector<2x8x8xbf16>
    %94 = vector.shape_cast %84 : vector<16x8xf32> to vector<2x8x8xf32>
    %95 = arith.truncf %94 : vector<2x8x8xf32> to vector<2x8x8xbf16>
    %96 = vector.shape_cast %89 : vector<16x8xf32> to vector<2x8x8xf32>
    %97 = arith.truncf %96 : vector<2x8x8xf32> to vector<2x8x8xbf16>
    "tpu.trace_start"() <{level = 10 : i32, message = "btd,bsd->bts"}> : () -> ()
    %cst_55 = arith.constant dense<0.000000e+00> : vector<2x8x8xf32>
    %98 = tpu.matmul %93, %95, %cst_55 {dimension_numbers = #tpu.dot_dimension_numbers<[2], [2], [1], [1], [0, 0, 0, 1, 1, 1], [0], [0]>} : vector<2x8x8xbf16>, vector<2x8x8xbf16>, vector<2x8x8xf32> -> vector<2x8x8xf32>
    %cst_56 = arith.constant 0xFF800000 : f32
    "tpu.trace_stop"() : () -> ()
    %99 = vector.shape_cast %6 : vector<1x8x8xi1> to vector<1x8x8xi1>
    %100 = vector.broadcast %99 : vector<1x8x8xi1> to vector<2x8x8xi1>
    %101 = vector.broadcast %cst_56 : f32 to vector<2x8x8xf32>
    %102 = arith.select %100, %98, %101 : vector<2x8x8xi1>, vector<2x8x8xf32>
    %cst_57 = arith.constant dense<0xFF800000> : vector<2x8xf32>
    %103 = vector.multi_reduction <maximumf>, %102, %cst_57 [2] : vector<2x8x8xf32> to vector<2x8xf32>
    %104 = vector.shape_cast %103 : vector<2x8xf32> to vector<2x8x1xf32>
    %105 = vector.broadcast %104 : vector<2x8x1xf32> to vector<2x8x8xf32>
    %106 = arith.subf %102, %105 : vector<2x8x8xf32>
    %107 = math.exp %106 : vector<2x8x8xf32>
    %cst_58 = arith.constant dense<0.000000e+00> : vector<2x8xf32>
    %108 = vector.multi_reduction <add>, %107, %cst_58 [2] : vector<2x8x8xf32> to vector<2x8xf32>
    %109 = vector.shape_cast %108 : vector<2x8xf32> to vector<2x8x1xf32>
    %110 = tpu.reciprocal %109 {approx = true} : vector<2x8x1xf32> -> vector<2x8x1xf32>
    %111 = vector.broadcast %110 : vector<2x8x1xf32> to vector<2x8x8xf32>
    %112 = arith.mulf %107, %111 : vector<2x8x8xf32>
    %113 = arith.truncf %112 : vector<2x8x8xf32> to vector<2x8x8xbf16>
    "tpu.trace_start"() <{level = 10 : i32, message = "bts,bsd->btd"}> : () -> ()
    %cst_59 = arith.constant dense<0.000000e+00> : vector<2x8x8xf32>
    %114 = tpu.matmul %113, %97, %cst_59 {dimension_numbers = #tpu.dot_dimension_numbers<[2], [1], [1], [2], [0, 0, 0, 1, 1, 2], [0], [0]>} : vector<2x8x8xbf16>, vector<2x8x8xbf16>, vector<2x8x8xf32> -> vector<2x8x8xf32>
    "tpu.trace_stop"() : () -> ()
    %115 = vector.shape_cast %114 : vector<2x8x8xf32> to vector<16x8xf32>
    %116 = arith.truncf %115 : vector<16x8xf32> to vector<16x8xbf16>
    %c1_60 = arith.constant 1 : index
    %c0_61 = arith.constant 0 : index
    %c0_62 = arith.constant 0 : index
    %117 = vector.load %arg7[%c1_60, %c0_61, %c0_62] : memref<4x8x32xf32, #tpu.memory_space<vmem>>, vector<1x8x32xf32>
    %118 = vector.shape_cast %117 : vector<1x8x32xf32> to vector<8x32xf32>
    %119 = arith.truncf %118 : vector<8x32xf32> to vector<8x32xbf16>
    %cst_63 = arith.constant dense<0.000000e+00> : vector<16x32xf32>
    %120 = tpu.matmul %116, %119, %cst_63 {dimension_numbers = #tpu.dot_dimension_numbers<[1], [0], [0], [1], [0, 0, 1, 1], [], []>} : vector<16x8xbf16>, vector<8x32xbf16>, vector<16x32xf32> -> vector<16x32xf32>
    %121 = arith.addf %65, %120 : vector<16x32xf32>
    %c2 = arith.constant 2 : index
    %c0_64 = arith.constant 0 : index
    %c0_65 = arith.constant 0 : index
    %122 = vector.load %arg1[%c2, %c0_64, %c0_65] : memref<4x32x8xf32, #tpu.memory_space<vmem>>, vector<1x32x8xf32>
    %123 = vector.shape_cast %122 : vector<1x32x8xf32> to vector<32x8xf32>
    %124 = arith.truncf %123 : vector<32x8xf32> to vector<32x8xbf16>
    %c2_66 = arith.constant 2 : index
    %c0_67 = arith.constant 0 : index
    %c0_68 = arith.constant 0 : index
    %125 = vector.load %arg2[%c2_66, %c0_67, %c0_68] : memref<4x32x8xf32, #tpu.memory_space<vmem>>, vector<1x32x8xf32>
    %126 = vector.shape_cast %125 : vector<1x32x8xf32> to vector<32x8xf32>
    %127 = arith.truncf %126 : vector<32x8xf32> to vector<32x8xbf16>
    %c2_69 = arith.constant 2 : index
    %c0_70 = arith.constant 0 : index
    %c0_71 = arith.constant 0 : index
    %128 = vector.load %arg3[%c2_69, %c0_70, %c0_71] : memref<4x32x8xf32, #tpu.memory_space<vmem>>, vector<1x32x8xf32>
    %129 = vector.shape_cast %128 : vector<1x32x8xf32> to vector<32x8xf32>
    %130 = arith.truncf %129 : vector<32x8xf32> to vector<32x8xbf16>
    %cst_72 = arith.constant dense<0.000000e+00> : vector<16x8xf32>
    %131 = tpu.matmul %2, %124, %cst_72 {dimension_numbers = #tpu.dot_dimension_numbers<[1], [0], [0], [1], [0, 0, 1, 1], [], []>} : vector<16x32xbf16>, vector<32x8xbf16>, vector<16x8xf32> -> vector<16x8xf32>
    %c2_73 = arith.constant 2 : index
    %c0_74 = arith.constant 0 : index
    %c0_75 = arith.constant 0 : index
    %132 = vector.load %arg4[%c2_73, %c0_74, %c0_75] : memref<4x1x8xf32, #tpu.memory_space<vmem>>, vector<1x1x8xf32>
    %133 = vector.shape_cast %132 : vector<1x1x8xf32> to vector<1x8xf32>
    %134 = vector.broadcast %133 : vector<1x8xf32> to vector<16x8xf32>
    %135 = arith.addf %131, %134 : vector<16x8xf32>
    %cst_76 = arith.constant dense<0.000000e+00> : vector<16x8xf32>
    %136 = tpu.matmul %2, %127, %cst_76 {dimension_numbers = #tpu.dot_dimension_numbers<[1], [0], [0], [1], [0, 0, 1, 1], [], []>} : vector<16x32xbf16>, vector<32x8xbf16>, vector<16x8xf32> -> vector<16x8xf32>
    %c2_77 = arith.constant 2 : index
    %c0_78 = arith.constant 0 : index
    %c0_79 = arith.constant 0 : index
    %137 = vector.load %arg5[%c2_77, %c0_78, %c0_79] : memref<4x1x8xf32, #tpu.memory_space<vmem>>, vector<1x1x8xf32>
    %138 = vector.shape_cast %137 : vector<1x1x8xf32> to vector<1x8xf32>
    %139 = vector.broadcast %138 : vector<1x8xf32> to vector<16x8xf32>
    %140 = arith.addf %136, %139 : vector<16x8xf32>
    %cst_80 = arith.constant dense<0.000000e+00> : vector<16x8xf32>
    %141 = tpu.matmul %2, %130, %cst_80 {dimension_numbers = #tpu.dot_dimension_numbers<[1], [0], [0], [1], [0, 0, 1, 1], [], []>} : vector<16x32xbf16>, vector<32x8xbf16>, vector<16x8xf32> -> vector<16x8xf32>
    %c2_81 = arith.constant 2 : index
    %c0_82 = arith.constant 0 : index
    %c0_83 = arith.constant 0 : index
    %142 = vector.load %arg6[%c2_81, %c0_82, %c0_83] : memref<4x1x8xf32, #tpu.memory_space<vmem>>, vector<1x1x8xf32>
    %143 = vector.shape_cast %142 : vector<1x1x8xf32> to vector<1x8xf32>
    %144 = vector.broadcast %143 : vector<1x8xf32> to vector<16x8xf32>
    %145 = arith.addf %141, %144 : vector<16x8xf32>
    %cst_84 = arith.constant 0.353553385 : f32
    %146 = vector.broadcast %cst_84 : f32 to vector<16x8xf32>
    %147 = arith.mulf %135, %146 : vector<16x8xf32>
    %148 = vector.shape_cast %147 : vector<16x8xf32> to vector<2x8x8xf32>
    %149 = arith.truncf %148 : vector<2x8x8xf32> to vector<2x8x8xbf16>
    %150 = vector.shape_cast %140 : vector<16x8xf32> to vector<2x8x8xf32>
    %151 = arith.truncf %150 : vector<2x8x8xf32> to vector<2x8x8xbf16>
    %152 = vector.shape_cast %145 : vector<16x8xf32> to vector<2x8x8xf32>
    %153 = arith.truncf %152 : vector<2x8x8xf32> to vector<2x8x8xbf16>
    "tpu.trace_start"() <{level = 10 : i32, message = "btd,bsd->bts"}> : () -> ()
    %cst_85 = arith.constant dense<0.000000e+00> : vector<2x8x8xf32>
    %154 = tpu.matmul %149, %151, %cst_85 {dimension_numbers = #tpu.dot_dimension_numbers<[2], [2], [1], [1], [0, 0, 0, 1, 1, 1], [0], [0]>} : vector<2x8x8xbf16>, vector<2x8x8xbf16>, vector<2x8x8xf32> -> vector<2x8x8xf32>
    %cst_86 = arith.constant 0xFF800000 : f32
    "tpu.trace_stop"() : () -> ()
    %155 = vector.shape_cast %6 : vector<1x8x8xi1> to vector<1x8x8xi1>
    %156 = vector.broadcast %155 : vector<1x8x8xi1> to vector<2x8x8xi1>
    %157 = vector.broadcast %cst_86 : f32 to vector<2x8x8xf32>
    %158 = arith.select %156, %154, %157 : vector<2x8x8xi1>, vector<2x8x8xf32>
    %cst_87 = arith.constant dense<0xFF800000> : vector<2x8xf32>
    %159 = vector.multi_reduction <maximumf>, %158, %cst_87 [2] : vector<2x8x8xf32> to vector<2x8xf32>
    %160 = vector.shape_cast %159 : vector<2x8xf32> to vector<2x8x1xf32>
    %161 = vector.broadcast %160 : vector<2x8x1xf32> to vector<2x8x8xf32>
    %162 = arith.subf %158, %161 : vector<2x8x8xf32>
    %163 = math.exp %162 : vector<2x8x8xf32>
    %cst_88 = arith.constant dense<0.000000e+00> : vector<2x8xf32>
    %164 = vector.multi_reduction <add>, %163, %cst_88 [2] : vector<2x8x8xf32> to vector<2x8xf32>
    %165 = vector.shape_cast %164 : vector<2x8xf32> to vector<2x8x1xf32>
    %166 = tpu.reciprocal %165 {approx = true} : vector<2x8x1xf32> -> vector<2x8x1xf32>
    %167 = vector.broadcast %166 : vector<2x8x1xf32> to vector<2x8x8xf32>
    %168 = arith.mulf %163, %167 : vector<2x8x8xf32>
    %169 = arith.truncf %168 : vector<2x8x8xf32> to vector<2x8x8xbf16>
    "tpu.trace_start"() <{level = 10 : i32, message = "bts,bsd->btd"}> : () -> ()
    %cst_89 = arith.constant dense<0.000000e+00> : vector<2x8x8xf32>
    %170 = tpu.matmul %169, %153, %cst_89 {dimension_numbers = #tpu.dot_dimension_numbers<[2], [1], [1], [2], [0, 0, 0, 1, 1, 2], [0], [0]>} : vector<2x8x8xbf16>, vector<2x8x8xbf16>, vector<2x8x8xf32> -> vector<2x8x8xf32>
    "tpu.trace_stop"() : () -> ()
    %171 = vector.shape_cast %170 : vector<2x8x8xf32> to vector<16x8xf32>
    %172 = arith.truncf %171 : vector<16x8xf32> to vector<16x8xbf16>
    %c2_90 = arith.constant 2 : index
    %c0_91 = arith.constant 0 : index
    %c0_92 = arith.constant 0 : index
    %173 = vector.load %arg7[%c2_90, %c0_91, %c0_92] : memref<4x8x32xf32, #tpu.memory_space<vmem>>, vector<1x8x32xf32>
    %174 = vector.shape_cast %173 : vector<1x8x32xf32> to vector<8x32xf32>
    %175 = arith.truncf %174 : vector<8x32xf32> to vector<8x32xbf16>
    %cst_93 = arith.constant dense<0.000000e+00> : vector<16x32xf32>
    %176 = tpu.matmul %172, %175, %cst_93 {dimension_numbers = #tpu.dot_dimension_numbers<[1], [0], [0], [1], [0, 0, 1, 1], [], []>} : vector<16x8xbf16>, vector<8x32xbf16>, vector<16x32xf32> -> vector<16x32xf32>
    %177 = arith.addf %121, %176 : vector<16x32xf32>
    %c3 = arith.constant 3 : index
    %c0_94 = arith.constant 0 : index
    %c0_95 = arith.constant 0 : index
    %178 = vector.load %arg1[%c3, %c0_94, %c0_95] : memref<4x32x8xf32, #tpu.memory_space<vmem>>, vector<1x32x8xf32>
    %179 = vector.shape_cast %178 : vector<1x32x8xf32> to vector<32x8xf32>
    %180 = arith.truncf %179 : vector<32x8xf32> to vector<32x8xbf16>
    %c3_96 = arith.constant 3 : index
    %c0_97 = arith.constant 0 : index
    %c0_98 = arith.constant 0 : index
    %181 = vector.load %arg2[%c3_96, %c0_97, %c0_98] : memref<4x32x8xf32, #tpu.memory_space<vmem>>, vector<1x32x8xf32>
    %182 = vector.shape_cast %181 : vector<1x32x8xf32> to vector<32x8xf32>
    %183 = arith.truncf %182 : vector<32x8xf32> to vector<32x8xbf16>
    %c3_99 = arith.constant 3 : index
    %c0_100 = arith.constant 0 : index
    %c0_101 = arith.constant 0 : index
    %184 = vector.load %arg3[%c3_99, %c0_100, %c0_101] : memref<4x32x8xf32, #tpu.memory_space<vmem>>, vector<1x32x8xf32>
    %185 = vector.shape_cast %184 : vector<1x32x8xf32> to vector<32x8xf32>
    %186 = arith.truncf %185 : vector<32x8xf32> to vector<32x8xbf16>
    %cst_102 = arith.constant dense<0.000000e+00> : vector<16x8xf32>
    %187 = tpu.matmul %2, %180, %cst_102 {dimension_numbers = #tpu.dot_dimension_numbers<[1], [0], [0], [1], [0, 0, 1, 1], [], []>} : vector<16x32xbf16>, vector<32x8xbf16>, vector<16x8xf32> -> vector<16x8xf32>
    %c3_103 = arith.constant 3 : index
    %c0_104 = arith.constant 0 : index
    %c0_105 = arith.constant 0 : index
    %188 = vector.load %arg4[%c3_103, %c0_104, %c0_105] : memref<4x1x8xf32, #tpu.memory_space<vmem>>, vector<1x1x8xf32>
    %189 = vector.shape_cast %188 : vector<1x1x8xf32> to vector<1x8xf32>
    %190 = vector.broadcast %189 : vector<1x8xf32> to vector<16x8xf32>
    %191 = arith.addf %187, %190 : vector<16x8xf32>
    %cst_106 = arith.constant dense<0.000000e+00> : vector<16x8xf32>
    %192 = tpu.matmul %2, %183, %cst_106 {dimension_numbers = #tpu.dot_dimension_numbers<[1], [0], [0], [1], [0, 0, 1, 1], [], []>} : vector<16x32xbf16>, vector<32x8xbf16>, vector<16x8xf32> -> vector<16x8xf32>
    %c3_107 = arith.constant 3 : index
    %c0_108 = arith.constant 0 : index
    %c0_109 = arith.constant 0 : index
    %193 = vector.load %arg5[%c3_107, %c0_108, %c0_109] : memref<4x1x8xf32, #tpu.memory_space<vmem>>, vector<1x1x8xf32>
    %194 = vector.shape_cast %193 : vector<1x1x8xf32> to vector<1x8xf32>
    %195 = vector.broadcast %194 : vector<1x8xf32> to vector<16x8xf32>
    %196 = arith.addf %192, %195 : vector<16x8xf32>
    %cst_110 = arith.constant dense<0.000000e+00> : vector<16x8xf32>
    %197 = tpu.matmul %2, %186, %cst_110 {dimension_numbers = #tpu.dot_dimension_numbers<[1], [0], [0], [1], [0, 0, 1, 1], [], []>} : vector<16x32xbf16>, vector<32x8xbf16>, vector<16x8xf32> -> vector<16x8xf32>
    %c3_111 = arith.constant 3 : index
    %c0_112 = arith.constant 0 : index
    %c0_113 = arith.constant 0 : index
    %198 = vector.load %arg6[%c3_111, %c0_112, %c0_113] : memref<4x1x8xf32, #tpu.memory_space<vmem>>, vector<1x1x8xf32>
    %199 = vector.shape_cast %198 : vector<1x1x8xf32> to vector<1x8xf32>
    %200 = vector.broadcast %199 : vector<1x8xf32> to vector<16x8xf32>
    %201 = arith.addf %197, %200 : vector<16x8xf32>
    %cst_114 = arith.constant 0.353553385 : f32
    %202 = vector.broadcast %cst_114 : f32 to vector<16x8xf32>
    %203 = arith.mulf %191, %202 : vector<16x8xf32>
    %204 = vector.shape_cast %203 : vector<16x8xf32> to vector<2x8x8xf32>
    %205 = arith.truncf %204 : vector<2x8x8xf32> to vector<2x8x8xbf16>
    %206 = vector.shape_cast %196 : vector<16x8xf32> to vector<2x8x8xf32>
    %207 = arith.truncf %206 : vector<2x8x8xf32> to vector<2x8x8xbf16>
    %208 = vector.shape_cast %201 : vector<16x8xf32> to vector<2x8x8xf32>
    %209 = arith.truncf %208 : vector<2x8x8xf32> to vector<2x8x8xbf16>
    "tpu.trace_start"() <{level = 10 : i32, message = "btd,bsd->bts"}> : () -> ()
    %cst_115 = arith.constant dense<0.000000e+00> : vector<2x8x8xf32>
    %210 = tpu.matmul %205, %207, %cst_115 {dimension_numbers = #tpu.dot_dimension_numbers<[2], [2], [1], [1], [0, 0, 0, 1, 1, 1], [0], [0]>} : vector<2x8x8xbf16>, vector<2x8x8xbf16>, vector<2x8x8xf32> -> vector<2x8x8xf32>
    %cst_116 = arith.constant 0xFF800000 : f32
    "tpu.trace_stop"() : () -> ()
    %211 = vector.shape_cast %6 : vector<1x8x8xi1> to vector<1x8x8xi1>
    %212 = vector.broadcast %211 : vector<1x8x8xi1> to vector<2x8x8xi1>
    %213 = vector.broadcast %cst_116 : f32 to vector<2x8x8xf32>
    %214 = arith.select %212, %210, %213 : vector<2x8x8xi1>, vector<2x8x8xf32>
    %cst_117 = arith.constant dense<0xFF800000> : vector<2x8xf32>
    %215 = vector.multi_reduction <maximumf>, %214, %cst_117 [2] : vector<2x8x8xf32> to vector<2x8xf32>
    %216 = vector.shape_cast %215 : vector<2x8xf32> to vector<2x8x1xf32>
    %217 = vector.broadcast %216 : vector<2x8x1xf32> to vector<2x8x8xf32>
    %218 = arith.subf %214, %217 : vector<2x8x8xf32>
    %219 = math.exp %218 : vector<2x8x8xf32>
    %cst_118 = arith.constant dense<0.000000e+00> : vector<2x8xf32>
    %220 = vector.multi_reduction <add>, %219, %cst_118 [2] : vector<2x8x8xf32> to vector<2x8xf32>
    %221 = vector.shape_cast %220 : vector<2x8xf32> to vector<2x8x1xf32>
    %222 = tpu.reciprocal %221 {approx = true} : vector<2x8x1xf32> -> vector<2x8x1xf32>
    %223 = vector.broadcast %222 : vector<2x8x1xf32> to vector<2x8x8xf32>
    %224 = arith.mulf %219, %223 : vector<2x8x8xf32>
    %225 = arith.truncf %224 : vector<2x8x8xf32> to vector<2x8x8xbf16>
    "tpu.trace_start"() <{level = 10 : i32, message = "bts,bsd->btd"}> : () -> ()
    %cst_119 = arith.constant dense<0.000000e+00> : vector<2x8x8xf32>
    %226 = tpu.matmul %225, %209, %cst_119 {dimension_numbers = #tpu.dot_dimension_numbers<[2], [1], [1], [2], [0, 0, 0, 1, 1, 2], [0], [0]>} : vector<2x8x8xbf16>, vector<2x8x8xbf16>, vector<2x8x8xf32> -> vector<2x8x8xf32>
    "tpu.trace_stop"() : () -> ()
    %227 = vector.shape_cast %226 : vector<2x8x8xf32> to vector<16x8xf32>
    %228 = arith.truncf %227 : vector<16x8xf32> to vector<16x8xbf16>
    %c3_120 = arith.constant 3 : index
    %c0_121 = arith.constant 0 : index
    %c0_122 = arith.constant 0 : index
    %229 = vector.load %arg7[%c3_120, %c0_121, %c0_122] : memref<4x8x32xf32, #tpu.memory_space<vmem>>, vector<1x8x32xf32>
    %230 = vector.shape_cast %229 : vector<1x8x32xf32> to vector<8x32xf32>
    %231 = arith.truncf %230 : vector<8x32xf32> to vector<8x32xbf16>
    %cst_123 = arith.constant dense<0.000000e+00> : vector<16x32xf32>
    %232 = tpu.matmul %228, %231, %cst_123 {dimension_numbers = #tpu.dot_dimension_numbers<[1], [0], [0], [1], [0, 0, 1, 1], [], []>} : vector<16x8xbf16>, vector<8x32xbf16>, vector<16x32xf32> -> vector<16x32xf32>
    %233 = arith.addf %177, %232 : vector<16x32xf32>
    %234 = vector.shape_cast %233 : vector<16x32xf32> to vector<2x8x32xf32>
    %c0_124 = arith.constant 0 : index
    %c0_125 = arith.constant 0 : index
    %c0_126 = arith.constant 0 : index
    %235 = vector.load %arg9[%c0_124, %c0_125, %c0_126] : memref<2x8x32xf32, #tpu.memory_space<vmem>>, vector<2x8x32xf32>
    tpu.vector_store %arg9[%c0_124, %c0_125, %c0_126], %234 {strides = array<i32>} : memref<2x8x32xf32, #tpu.memory_space<vmem>>, vector<2x8x32xf32>,
    return
  }
}

</mosaic_0001>

<llo_original>
// kernel: causal_self_attention.1
$region0: #{causal_self_attention.1}
  #allocation0 [shape = 'u32[]', space=smem, size = 0x4, offset = 0x4, fixed_abs, tag = 'smem constant byte address 0x4 - core index']
  #allocation1 [shape = 'u32[72,128]{1,0:T(1,128)}', space=vmem, size = 0x9000, scoped, tag = 'internal scratch']
  %s0 = inlined_call_operand.vmem [shape: f32[2,8,32], index: 0, kind: input, shape index: {}]
  %s1 = inlined_call_operand.vmem [shape: f32[4,32,8], index: 1, kind: input, shape index: {}]
  %s2 = inlined_call_operand.vmem [shape: f32[4,32,8], index: 2, kind: input, shape index: {}]
  %s3 = inlined_call_operand.vmem [shape: f32[4,32,8], index: 3, kind: input, shape index: {}]
  %s4 = inlined_call_operand.vmem [shape: f32[4,1,8], index: 4, kind: input, shape index: {}]
  %s5 = inlined_call_operand.vmem [shape: f32[4,1,8], index: 5, kind: input, shape index: {}]
  %s6 = inlined_call_operand.vmem [shape: f32[4,1,8], index: 6, kind: input, shape index: {}]
  %s7 = inlined_call_operand.vmem [shape: f32[4,8,32], index: 7, kind: input, shape index: {}]
  %s8 = inlined_call_operand.vmem [shape: f32[1,32], index: 8, kind: input, shape index: {}]
  %s9 = inlined_call_operand.hbm [shape: f32[2,8,32], index: 9, kind: output, shape index: {}]
  %s10 = sld [smem:[#allocation0]]
  $region46: #{causal_self_attention.1} parent=0
    _
  %s12 = ssub.s32 1, %s10
  %s13 = scalar_select 0, %s12, %s10
  $region1: #{causal_self_attention.1} parent=0
    #allocation2 [shape = 'u8[8192]{0}', space=vmem, size = 0x2000, scoped, tag = 'output window, operand 0, single buffered']
    #allocation3 [shape = 's32[1]{0}', space=sflag, size = 0x4, scoped, tag = 'scoped memory for causal_self_attention.1']
    %14 = vsyncpa [#allocation3], 0
    // Predicated region
    $region2: #{causal_self_attention.1} parent=1 // pred_check
      _
    $region3: #{causal_self_attention.1} parent=1 // pred_check_branch
      %16 = sbr.rel (0) target = $region5
    $region4: #{causal_self_attention.1} parent=1 // pred_region
      _
    $region5: #{causal_self_attention.1} parent=1 // pred_fallthru
      _
    // Predicated region
    $region6: #{causal_self_attention.1} parent=1 // pred_check
      _
    $region7: #{causal_self_attention.1} parent=1 // pred_check_branch
      %18 = sbr.rel (0) target = $region9
    $region8: #{causal_self_attention.1} parent=1 // pred_region
      _
    $region9: #{causal_self_attention.1} parent=1 // pred_fallthru
      _
    // Predicated region
    $region10: #{causal_self_attention.1} parent=1 // pred_check
      _
    $region11: #{causal_self_attention.1} parent=1 // pred_check_branch
      %20 = sbr.rel (0) target = $region13
    $region12: #{causal_self_attention.1} parent=1 // pred_region
      _
    $region13: #{causal_self_attention.1} parent=1 // pred_fallthru
      _
    // Predicated region
    $region14: #{causal_self_attention.1} parent=1 // pred_check
      _
    $region15: #{causal_self_attention.1} parent=1 // pred_check_branch
      %22 = sbr.rel (0) target = $region17
    $region16: #{causal_self_attention.1} parent=1 // pred_region
      _
    $region17: #{causal_self_attention.1} parent=1 // pred_fallthru
      _
    // Predicated region
    $region18: #{causal_self_attention.1} parent=1 // pred_check
      _
    $region19: #{causal_self_attention.1} parent=1 // pred_check_branch
      %24 = sbr.rel (0) target = $region21
    $region20: #{causal_self_attention.1} parent=1 // pred_region
      _
    $region21: #{causal_self_attention.1} parent=1 // pred_fallthru
      _
    // Predicated region
    $region22: #{causal_self_attention.1} parent=1 // pred_check
      _
    $region23: #{causal_self_attention.1} parent=1 // pred_check_branch
      %26 = sbr.rel (0) target = $region25
    $region24: #{causal_self_attention.1} parent=1 // pred_region
      _
    $region25: #{causal_self_attention.1} parent=1 // pred_fallthru
      _
    // Predicated region
    $region26: #{causal_self_attention.1} parent=1 // pred_check
      _
    $region27: #{causal_self_attention.1} parent=1 // pred_check_branch
      %28 = sbr.rel (0) target = $region29
    $region28: #{causal_self_attention.1} parent=1 // pred_region
      _
    $region29: #{causal_self_attention.1} parent=1 // pred_fallthru
      _
    // Predicated region
    $region30: #{causal_self_attention.1} parent=1 // pred_check
      _
    $region31: #{causal_self_attention.1} parent=1 // pred_check_branch
      %30 = sbr.rel (0) target = $region33
    $region32: #{causal_self_attention.1} parent=1 // pred_region
      _
    $region33: #{causal_self_attention.1} parent=1 // pred_fallthru
      _
    // Predicated region
    $region34: #{causal_self_attention.1} parent=1 // pred_check
      _
    $region35: #{causal_self_attention.1} parent=1 // pred_check_branch
      %32 = sbr.rel (0) target = $region37
    $region36: #{causal_self_attention.1} parent=1 // pred_region
      _
    $region37: #{causal_self_attention.1} parent=1 // pred_fallthru
      _
    %v34 = vld [vmem:[%s0] sm:$0xff]
    %v35 = vld [vmem:[%s0 + $0x8] sm:$0xff]
    %v36 = vpack.c.bf16 %v35, %v34
    %v37 = vlaneseq
    %v38 = vshrl.u32 %v37, 7
    %v39 = vlaneseq
    %v40 = vand.u32 %v39, 127
    %vm41 = vcmp.ge.s32.totalorder %v38, %v40
    %v42 = vld [vmem:[%s8] sm:$0x1]
    %v44 = vperm.slane %v42, 0
    %v46 = vld [vmem:[%s1] sm:$0xff]
    %v47 = vld [vmem:[%s1 + $0x8] sm:$0xff]
    %v48 = vld [vmem:[%s1 + $0x10] sm:$0xff]
    %v49 = vld [vmem:[%s1 + $0x18] sm:$0xff]
    %v50 = vpack.c.bf16 %v47, %v46
    %v51 = vpack.c.bf16 %v49, %v48
    %v52 = vld [vmem:[%s2] sm:$0xff]
    %v53 = vld [vmem:[%s2 + $0x8] sm:$0xff]
    %v54 = vld [vmem:[%s2 + $0x10] sm:$0xff]
    %v55 = vld [vmem:[%s2 + $0x18] sm:$0xff]
    %v56 = vpack.c.bf16 %v53, %v52
    %v57 = vpack.c.bf16 %v55, %v54
    %v58 = vld [vmem:[%s3] sm:$0xff]
    %v59 = vld [vmem:[%s3 + $0x8] sm:$0xff]
    %v60 = vld [vmem:[%s3 + $0x10] sm:$0xff]
    %v61 = vld [vmem:[%s3 + $0x18] sm:$0xff]
    %v62 = vpack.c.bf16 %v59, %v58
    %v63 = vpack.c.bf16 %v61, %v60
    %v64 = vld [vmem:[%s4] sm:$0x1]
    %v66 = vperm.slane %v64, 0
    %vm68 = vcmask 261120
    %v70 = vsel %vm68, %v36, 0
    %72 = vmatpush.bf16.msra.mxu0 0
    %73 = vmatpush.bf16.msra.mxu0 0
    %74 = vmatpush.bf16.msra.mxu0 0
    %75 = vmatpush.bf16.msra.mxu0 0
    %76 = vmatpush.bf16.msra.mxu0 0
    %77 = vmatpush.bf16.msra.mxu0 0
    %78 = vmatpush.bf16.msra.mxu0 %v51
    %79 = vmatpush.bf16.msra.mxu0 %v50
    %80 = vmatmul.bf16.gmra.mxu0 %v70
    %v81 = vpop.f32.mrf.mxu0
    %v82 = vadd.f32 %v66, %v81
    %v83 = vpop.f32.mrf.mxu0
    %v84 = vadd.f32 %v66, %v83
    %85 = vdwg.mxu0
    %v86 = vld [vmem:[%s5] sm:$0x1]
    %v88 = vperm.slane %v86, 0
    %90 = vmatpush.bf16.msra.mxu0 0
    %91 = vmatpush.bf16.msra.mxu0 0
    %92 = vmatpush.bf16.msra.mxu0 0
    %93 = vmatpush.bf16.msra.mxu0 0
    %94 = vmatpush.bf16.msra.mxu0 0
    %95 = vmatpush.bf16.msra.mxu0 0
    %96 = vmatpush.bf16.msra.mxu0 %v57
    %97 = vmatpush.bf16.msra.mxu0 %v56
    %98 = vmatmul.bf16.gmra.mxu0 %v70
    %v99 = vpop.f32.mrf.mxu0
    %v100 = vadd.f32 %v88, %v99
    %v101 = vpop.f32.mrf.mxu0
    %v102 = vadd.f32 %v88, %v101
    %103 = vdwg.mxu0
    %v104 = vld [vmem:[%s6] sm:$0x1]
    %v106 = vperm.slane %v104, 0
    %108 = vmatpush.bf16.msra.mxu0 0
    %109 = vmatpush.bf16.msra.mxu0 0
    %110 = vmatpush.bf16.msra.mxu0 0
    %111 = vmatpush.bf16.msra.mxu0 0
    %112 = vmatpush.bf16.msra.mxu0 0
    %113 = vmatpush.bf16.msra.mxu0 0
    %114 = vmatpush.bf16.msra.mxu0 %v63
    %115 = vmatpush.bf16.msra.mxu0 %v62
    %116 = vmatmul.bf16.gmra.mxu0 %v70
    %v117 = vpop.f32.mrf.mxu0
    %v118 = vadd.f32 %v106, %v117
    %v119 = vpop.f32.mrf.mxu0
    %v120 = vadd.f32 %v106, %v119
    %121 = vdwg.mxu0
    %v122 = vmul.f32 %v82, 0.35355338
    %v123 = vmul.f32 %v84, 0.35355338
    %v124 = vpack.c.bf16 %v122, %v122
    %v125 = vpack.c.bf16 %v123, %v123
    %v126 = vpack.c.bf16 %v100, %v100
    %v127 = vpack.c.bf16 %v102, %v102
    %v128 = vpack.c.bf16 %v118, %v118
    %v129 = vpack.c.bf16 %v120, %v120
    %vm130 = vcmask 64512
    %v132 = vsel %vm130, %v124, 0
    %v135 = vsel %vm130, %v126, 0
    %137 = vmatpush.bf16.xpose.msra.mxu0 0
    %138 = vmatpush.bf16.xpose.msra.mxu0 0
    %139 = vmatpush.bf16.xpose.msra.mxu0 0
    %140 = vmatpush.bf16.xpose.msra.mxu0 0
    %141 = vmatpush.bf16.xpose.msra.mxu0 0
    %142 = vmatpush.bf16.xpose.msra.mxu0 0
    %143 = vmatpush.bf16.xpose.msra.mxu0 0
    %144 = vmatpush.bf16.xpose.msra.mxu0 %v135
    %145 = vmatmul.bf16.gmra.mxu0 %v132
    %v146 = vpop.f32.mrf.mxu0
    %v147 = vadd.f32 0.0, %v146
    %v148 = vpop.f32.mrf.mxu0
    %149 = vdwg.mxu0
    %v151 = vsel %vm130, %v125, 0
    %v154 = vsel %vm130, %v127, 0
    %156 = vmatpush.bf16.xpose.msra.mxu0 0
    %157 = vmatpush.bf16.xpose.msra.mxu0 0
    %158 = vmatpush.bf16.xpose.msra.mxu0 0
    %159 = vmatpush.bf16.xpose.msra.mxu0 0
    %160 = vmatpush.bf16.xpose.msra.mxu0 0
    %161 = vmatpush.bf16.xpose.msra.mxu0 0
    %162 = vmatpush.bf16.xpose.msra.mxu0 0
    %163 = vmatpush.bf16.xpose.msra.mxu0 %v154
    %164 = vmatmul.bf16.gmra.mxu0 %v151
    %v165 = vpop.f32.mrf.mxu0
    %v166 = vadd.f32 0.0, %v165
    %v167 = vpop.f32.mrf.mxu0
    %168 = vdwg.mxu0
    %v169 = vsel %vm41, 1, 0
    %vm170 = vcmp.eq.s32.totalorder %v169, 1
    %v171 = vsel %vm170, %v147, -inf
    %v172 = vsel %vm170, %v166, -inf
    %v173 = vsel %vm130, %v171, -inf
    %174 = vmax.xlane.f32.xlu0 %v173
    %v175 = vpop.xlane.xlu0 %174
    %v176 = vsel %vm130, %v172, -inf
    %177 = vmax.xlane.f32.xlu0 %v176
    %v178 = vpop.xlane.xlu0 %177
    %v179 = vsub.f32 %v171, %v175
    %v180 = vsub.f32 %v172, %v178
    %v181 = vmul.f32 %v179, 1.442695
    %v182 = vpow.pop %v181
    %v183 = vmul.f32 %v180, 1.442695
    %v184 = vpow.pop %v183
    %v185 = vsel %vm130, %v182, 0.0
    %186 = vadd.xlane.f32.xlu0 %v185
    %v187 = vpop.xlane.xlu0 %186
    %v188 = vsel %vm130, %v184, 0.0
    %189 = vadd.xlane.f32.xlu0 %v188
    %v190 = vpop.xlane.xlu0 %189
    %v191 = vrcp.pop %v187
    %v192 = vrcp.pop %v190
    %v193 = vmul.f32 %v182, %v191
    %v194 = vmul.f32 %v184, %v192
    %v195 = vpack.c.bf16 %v193, %v193
    %v196 = vpack.c.bf16 %v194, %v194
    %v198 = vsel %vm130, %v195, 0
    %vm200 = vcmask 1043456
    %v202 = vsel %vm200, %v128, 0
    %204 = vmatpush.bf16.msra.mxu0 0
    %205 = vmatpush.bf16.msra.mxu0 0
    %206 = vmatpush.bf16.msra.mxu0 0
    %207 = vmatpush.bf16.msra.mxu0 0
    %208 = vmatpush.bf16.msra.mxu0 0
    %209 = vmatpush.bf16.msra.mxu0 0
    %210 = vmatpush.bf16.msra.mxu0 0
    %211 = vmatpush.bf16.msra.mxu0 %v202
    %212 = vmatmul.bf16.gmra.mxu0 %v198
    %v213 = vpop.f32.mrf.mxu0
    %v214 = vadd.f32 0.0, %v213
    %v215 = vpop.f32.mrf.mxu0
    %216 = vdwg.mxu0
    %v218 = vsel %vm130, %v196, 0
    %v221 = vsel %vm200, %v129, 0
    %223 = vmatpush.bf16.msra.mxu0 0
    %224 = vmatpush.bf16.msra.mxu0 0
    %225 = vmatpush.bf16.msra.mxu0 0
    %226 = vmatpush.bf16.msra.mxu0 0
    %227 = vmatpush.bf16.msra.mxu0 0
    %228 = vmatpush.bf16.msra.mxu0 0
    %229 = vmatpush.bf16.msra.mxu0 0
    %230 = vmatpush.bf16.msra.mxu0 %v221
    %231 = vmatmul.bf16.gmra.mxu0 %v218
    %v232 = vpop.f32.mrf.mxu0
    %v233 = vadd.f32 0.0, %v232
    %v234 = vpop.f32.mrf.mxu0
    %235 = vdwg.mxu0
    %v236 = vpack.c.bf16 %v233, %v214
    %v237 = vld [vmem:[%s7] sm:$0xff]
    %v238 = vpack.c.bf16 %v237, %v237
    %v240 = vsel %vm130, %v236, 0
    %v243 = vsel %vm200, %v238, 0
    %245 = vmatpush.bf16.msra.mxu0 0
    %246 = vmatpush.bf16.msra.mxu0 0
    %247 = vmatpush.bf16.msra.mxu0 0
    %248 = vmatpush.bf16.msra.mxu0 0
    %249 = vmatpush.bf16.msra.mxu0 0
    %250 = vmatpush.bf16.msra.mxu0 0
    %251 = vmatpush.bf16.msra.mxu0 0
    %252 = vmatpush.bf16.msra.mxu0 %v243
    %253 = vmatmul.bf16.gmra.mxu0 %v240
    %v254 = vpop.f32.mrf.mxu0
    %v255 = vadd.f32 0.0, %v254
    %v256 = vpop.f32.mrf.mxu0
    %v257 = vadd.f32 0.0, %v256
    %258 = vdwg.mxu0
    %v259 = vadd.f32 %v44, %v255
    %v260 = vadd.f32 %v44, %v257
    %s261 = scalar_lea.vmem %s1, 32
    %v262 = vld [vmem:[%s261] sm:$0xff]
    %v263 = vld [vmem:[%s261 + $0x8] sm:$0xff]
    %v264 = vld [vmem:[%s261 + $0x10] sm:$0xff]
    %v265 = vld [vmem:[%s261 + $0x18] sm:$0xff]
    %v266 = vpack.c.bf16 %v263, %v262
    %v267 = vpack.c.bf16 %v265, %v264
    %s268 = scalar_lea.vmem %s2, 32
    %v269 = vld [vmem:[%s268] sm:$0xff]
    %v270 = vld [vmem:[%s268 + $0x8] sm:$0xff]
    %v271 = vld [vmem:[%s268 + $0x10] sm:$0xff]
    %v272 = vld [vmem:[%s268 + $0x18] sm:$0xff]
    %v273 = vpack.c.bf16 %v270, %v269
    %v274 = vpack.c.bf16 %v272, %v271
    %s275 = scalar_lea.vmem %s3, 32
    %v276 = vld [vmem:[%s275] sm:$0xff]
    %v277 = vld [vmem:[%s275 + $0x8] sm:$0xff]
    %v278 = vld [vmem:[%s275 + $0x10] sm:$0xff]
    %v279 = vld [vmem:[%s275 + $0x18] sm:$0xff]
    %v280 = vpack.c.bf16 %v277, %v276
    %v281 = vpack.c.bf16 %v279, %v278
    %s282 = scalar_lea.vmem %s4, 1
    %v283 = vld [vmem:[%s282] sm:$0x1]
    %v285 = vperm.slane %v283, 0
    %287 = vmatpush.bf16.msra.mxu0 0
    %288 = vmatpush.bf16.msra.mxu0 0
    %289 = vmatpush.bf16.msra.mxu0 0
    %290 = vmatpush.bf16.msra.mxu0 0
    %291 = vmatpush.bf16.msra.mxu0 0
    %292 = vmatpush.bf16.msra.mxu0 0
    %293 = vmatpush.bf16.msra.mxu0 %v267
    %294 = vmatpush.bf16.msra.mxu0 %v266
    %295 = vmatmul.bf16.gmra.mxu0 %v70
    %v296 = vpop.f32.mrf.mxu0
    %v297 = vadd.f32 %v285, %v296
    %v298 = vpop.f32.mrf.mxu0
    %v299 = vadd.f32 %v285, %v298
    %300 = vdwg.mxu0
    %s301 = scalar_lea.vmem %s5, 1
    %v302 = vld [vmem:[%s301] sm:$0x1]
    %v304 = vperm.slane %v302, 0
    %306 = vmatpush.bf16.msra.mxu0 0
    %307 = vmatpush.bf16.msra.mxu0 0
    %308 = vmatpush.bf16.msra.mxu0 0
    %309 = vmatpush.bf16.msra.mxu0 0
    %310 = vmatpush.bf16.msra.mxu0 0
    %311 = vmatpush.bf16.msra.mxu0 0
    %312 = vmatpush.bf16.msra.mxu0 %v274
    %313 = vmatpush.bf16.msra.mxu0 %v273
    %314 = vmatmul.bf16.gmra.mxu0 %v70
    %v315 = vpop.f32.mrf.mxu0
    %v316 = vadd.f32 %v304, %v315
    %v317 = vpop.f32.mrf.mxu0
    %v318 = vadd.f32 %v304, %v317
    %319 = vdwg.mxu0
    %s320 = scalar_lea.vmem %s6, 1
    %v321 = vld [vmem:[%s320] sm:$0x1]
    %v323 = vperm.slane %v321, 0
    %325 = vmatpush.bf16.msra.mxu0 0
    %326 = vmatpush.bf16.msra.mxu0 0
    %327 = vmatpush.bf16.msra.mxu0 0
    %328 = vmatpush.bf16.msra.mxu0 0
    %329 = vmatpush.bf16.msra.mxu0 0
    %330 = vmatpush.bf16.msra.mxu0 0
    %331 = vmatpush.bf16.msra.mxu0 %v281
    %332 = vmatpush.bf16.msra.mxu0 %v280
    %333 = vmatmul.bf16.gmra.mxu0 %v70
    %v334 = vpop.f32.mrf.mxu0
    %v335 = vadd.f32 %v323, %v334
    %v336 = vpop.f32.mrf.mxu0
    %v337 = vadd.f32 %v323, %v336
    %338 = vdwg.mxu0
    %v339 = vmul.f32 %v297, 0.35355338
    %v340 = vmul.f32 %v299, 0.35355338
    %v341 = vpack.c.bf16 %v339, %v339
    %v342 = vpack.c.bf16 %v340, %v340
    %v343 = vpack.c.bf16 %v316, %v316
    %v344 = vpack.c.bf16 %v318, %v318
    %v345 = vpack.c.bf16 %v335, %v335
    %v346 = vpack.c.bf16 %v337, %v337
    %v348 = vsel %vm130, %v341, 0
    %v351 = vsel %vm130, %v343, 0
    %353 = vmatpush.bf16.xpose.msra.mxu0 0
    %354 = vmatpush.bf16.xpose.msra.mxu0 0
    %355 = vmatpush.bf16.xpose.msra.mxu0 0
    %356 = vmatpush.bf16.xpose.msra.mxu0 0
    %357 = vmatpush.bf16.xpose.msra.mxu0 0
    %358 = vmatpush.bf16.xpose.msra.mxu0 0
    %359 = vmatpush.bf16.xpose.msra.mxu0 0
    %360 = vmatpush.bf16.xpose.msra.mxu0 %v351
    %361 = vmatmul.bf16.gmra.mxu0 %v348
    %v362 = vpop.f32.mrf.mxu0
    %v363 = vadd.f32 0.0, %v362
    %v364 = vpop.f32.mrf.mxu0
    %365 = vdwg.mxu0
    %v367 = vsel %vm130, %v342, 0
    %v370 = vsel %vm130, %v344, 0
    %372 = vmatpush.bf16.xpose.msra.mxu0 0
    %373 = vmatpush.bf16.xpose.msra.mxu0 0
    %374 = vmatpush.bf16.xpose.msra.mxu0 0
    %375 = vmatpush.bf16.xpose.msra.mxu0 0
    %376 = vmatpush.bf16.xpose.msra.mxu0 0
    %377 = vmatpush.bf16.xpose.msra.mxu0 0
    %378 = vmatpush.bf16.xpose.msra.mxu0 0
    %379 = vmatpush.bf16.xpose.msra.mxu0 %v370
    %380 = vmatmul.bf16.gmra.mxu0 %v367
    %v381 = vpop.f32.mrf.mxu0
    %v382 = vadd.f32 0.0, %v381
    %v383 = vpop.f32.mrf.mxu0
    %384 = vdwg.mxu0
    %v385 = vsel %vm170, %v363, -inf
    %v386 = vsel %vm170, %v382, -inf
    %v387 = vsel %vm130, %v385, -inf
    %388 = vmax.xlane.f32.xlu0 %v387
    %v389 = vpop.xlane.xlu0 %388
    %v390 = vsel %vm130, %v386, -inf
    %391 = vmax.xlane.f32.xlu0 %v390
    %v392 = vpop.xlane.xlu0 %391
    %v393 = vsub.f32 %v385, %v389
    %v394 = vsub.f32 %v386, %v392
    %v395 = vmul.f32 %v393, 1.442695
    %v396 = vpow.pop %v395
    %v397 = vmul.f32 %v394, 1.442695
    %v398 = vpow.pop %v397
    %v399 = vsel %vm130, %v396, 0.0
    %400 = vadd.xlane.f32.xlu0 %v399
    %v401 = vpop.xlane.xlu0 %400
    %v402 = vsel %vm130, %v398, 0.0
    %403 = vadd.xlane.f32.xlu0 %v402
    %v404 = vpop.xlane.xlu0 %403
    %v405 = vrcp.pop %v401
    %v406 = vrcp.pop %v404
    %v407 = vmul.f32 %v396, %v405
    %v408 = vmul.f32 %v398, %v406
    %v409 = vpack.c.bf16 %v407, %v407
    %v410 = vpack.c.bf16 %v408, %v408
    %v412 = vsel %vm130, %v409, 0
    %v415 = vsel %vm200, %v345, 0
    %417 = vmatpush.bf16.msra.mxu0 0
    %418 = vmatpush.bf16.msra.mxu0 0
    %419 = vmatpush.bf16.msra.mxu0 0
    %420 = vmatpush.bf16.msra.mxu0 0
    %421 = vmatpush.bf16.msra.mxu0 0
    %422 = vmatpush.bf16.msra.mxu0 0
    %423 = vmatpush.bf16.msra.mxu0 0
    %424 = vmatpush.bf16.msra.mxu0 %v415
    %425 = vmatmul.bf16.gmra.mxu0 %v412
    %v426 = vpop.f32.mrf.mxu0
    %v427 = vadd.f32 0.0, %v426
    %v428 = vpop.f32.mrf.mxu0
    %429 = vdwg.mxu0
    %v431 = vsel %vm130, %v410, 0
    %v434 = vsel %vm200, %v346, 0
    %436 = vmatpush.bf16.msra.mxu0 0
    %437 = vmatpush.bf16.msra.mxu0 0
    %438 = vmatpush.bf16.msra.mxu0 0
    %439 = vmatpush.bf16.msra.mxu0 0
    %440 = vmatpush.bf16.msra.mxu0 0
    %441 = vmatpush.bf16.msra.mxu0 0
    %442 = vmatpush.bf16.msra.mxu0 0
    %443 = vmatpush.bf16.msra.mxu0 %v434
    %444 = vmatmul.bf16.gmra.mxu0 %v431
    %v445 = vpop.f32.mrf.mxu0
    %v446 = vadd.f32 0.0, %v445
    %v447 = vpop.f32.mrf.mxu0
    %448 = vdwg.mxu0
    %v449 = vpack.c.bf16 %v446, %v427
    %s450 = scalar_lea.vmem %s7, 8
    %v451 = vld [vmem:[%s450] sm:$0xff]
    %v452 = vpack.c.bf16 %v451, %v451
    %v454 = vsel %vm130, %v449, 0
    %v457 = vsel %vm200, %v452, 0
    %459 = vmatpush.bf16.msra.mxu0 0
    %460 = vmatpush.bf16.msra.mxu0 0
    %461 = vmatpush.bf16.msra.mxu0 0
    %462 = vmatpush.bf16.msra.mxu0 0
    %463 = vmatpush.bf16.msra.mxu0 0
    %464 = vmatpush.bf16.msra.mxu0 0
    %465 = vmatpush.bf16.msra.mxu0 0
    %466 = vmatpush.bf16.msra.mxu0 %v457
    %467 = vmatmul.bf16.gmra.mxu0 %v454
    %v468 = vpop.f32.mrf.mxu0
    %v469 = vadd.f32 0.0, %v468
    %v470 = vpop.f32.mrf.mxu0
    %v471 = vadd.f32 0.0, %v470
    %472 = vdwg.mxu0
    %v473 = vadd.f32 %v259, %v469
    %v474 = vadd.f32 %v260, %v471
    %s475 = scalar_lea.vmem %s1, 64
    %v476 = vld [vmem:[%s475] sm:$0xff]
    %v477 = vld [vmem:[%s475 + $0x8] sm:$0xff]
    %v478 = vld [vmem:[%s475 + $0x10] sm:$0xff]
    %v479 = vld [vmem:[%s475 + $0x18] sm:$0xff]
    %v480 = vpack.c.bf16 %v477, %v476
    %v481 = vpack.c.bf16 %v479, %v478
    %s482 = scalar_lea.vmem %s2, 64
    %v483 = vld [vmem:[%s482] sm:$0xff]
    %v484 = vld [vmem:[%s482 + $0x8] sm:$0xff]
    %v485 = vld [vmem:[%s482 + $0x10] sm:$0xff]
    %v486 = vld [vmem:[%s482 + $0x18] sm:$0xff]
    %v487 = vpack.c.bf16 %v484, %v483
    %v488 = vpack.c.bf16 %v486, %v485
    %s489 = scalar_lea.vmem %s3, 64
    %v490 = vld [vmem:[%s489] sm:$0xff]
    %v491 = vld [vmem:[%s489 + $0x8] sm:$0xff]
    %v492 = vld [vmem:[%s489 + $0x10] sm:$0xff]
    %v493 = vld [vmem:[%s489 + $0x18] sm:$0xff]
    %v494 = vpack.c.bf16 %v491, %v490
    %v495 = vpack.c.bf16 %v493, %v492
    %s496 = scalar_lea.vmem %s4, 2
    %v497 = vld [vmem:[%s496] sm:$0x1]
    %v499 = vperm.slane %v497, 0
    %501 = vmatpush.bf16.msra.mxu0 0
    %502 = vmatpush.bf16.msra.mxu0 0
    %503 = vmatpush.bf16.msra.mxu0 0
    %504 = vmatpush.bf16.msra.mxu0 0
    %505 = vmatpush.bf16.msra.mxu0 0
    %506 = vmatpush.bf16.msra.mxu0 0
    %507 = vmatpush.bf16.msra.mxu0 %v481
    %508 = vmatpush.bf16.msra.mxu0 %v480
    %509 = vmatmul.bf16.gmra.mxu0 %v70
    %v510 = vpop.f32.mrf.mxu0
    %v511 = vadd.f32 %v499, %v510
    %v512 = vpop.f32.mrf.mxu0
    %v513 = vadd.f32 %v499, %v512
    %514 = vdwg.mxu0
    %s515 = scalar_lea.vmem %s5, 2
    %v516 = vld [vmem:[%s515] sm:$0x1]
    %v518 = vperm.slane %v516, 0
    %520 = vmatpush.bf16.msra.mxu0 0
    %521 = vmatpush.bf16.msra.mxu0 0
    %522 = vmatpush.bf16.msra.mxu0 0
    %523 = vmatpush.bf16.msra.mxu0 0
    %524 = vmatpush.bf16.msra.mxu0 0
    %525 = vmatpush.bf16.msra.mxu0 0
    %526 = vmatpush.bf16.msra.mxu0 %v488
    %527 = vmatpush.bf16.msra.mxu0 %v487
    %528 = vmatmul.bf16.gmra.mxu0 %v70
    %v529 = vpop.f32.mrf.mxu0
    %v530 = vadd.f32 %v518, %v529
    %v531 = vpop.f32.mrf.mxu0
    %v532 = vadd.f32 %v518, %v531
    %533 = vdwg.mxu0
    %s534 = scalar_lea.vmem %s6, 2
    %v535 = vld [vmem:[%s534] sm:$0x1]
    %v537 = vperm.slane %v535, 0
    %539 = vmatpush.bf16.msra.mxu0 0
    %540 = vmatpush.bf16.msra.mxu0 0
    %541 = vmatpush.bf16.msra.mxu0 0
    %542 = vmatpush.bf16.msra.mxu0 0
    %543 = vmatpush.bf16.msra.mxu0 0
    %544 = vmatpush.bf16.msra.mxu0 0
    %545 = vmatpush.bf16.msra.mxu0 %v495
    %546 = vmatpush.bf16.msra.mxu0 %v494
    %547 = vmatmul.bf16.gmra.mxu0 %v70
    %v548 = vpop.f32.mrf.mxu0
    %v549 = vadd.f32 %v537, %v548
    %v550 = vpop.f32.mrf.mxu0
    %v551 = vadd.f32 %v537, %v550
    %552 = vdwg.mxu0
    %v553 = vmul.f32 %v511, 0.35355338
    %v554 = vmul.f32 %v513, 0.35355338
    %v555 = vpack.c.bf16 %v553, %v553
    %v556 = vpack.c.bf16 %v554, %v554
    %v557 = vpack.c.bf16 %v530, %v530
    %v558 = vpack.c.bf16 %v532, %v532
    %v559 = vpack.c.bf16 %v549, %v549
    %v560 = vpack.c.bf16 %v551, %v551
    %v562 = vsel %vm130, %v555, 0
    %v565 = vsel %vm130, %v557, 0
    %567 = vmatpush.bf16.xpose.msra.mxu0 0
    %568 = vmatpush.bf16.xpose.msra.mxu0 0
    %569 = vmatpush.bf16.xpose.msra.mxu0 0
    %570 = vmatpush.bf16.xpose.msra.mxu0 0
    %571 = vmatpush.bf16.xpose.msra.mxu0 0
    %572 = vmatpush.bf16.xpose.msra.mxu0 0
    %573 = vmatpush.bf16.xpose.msra.mxu0 0
    %574 = vmatpush.bf16.xpose.msra.mxu0 %v565
    %575 = vmatmul.bf16.gmra.mxu0 %v562
    %v576 = vpop.f32.mrf.mxu0
    %v577 = vadd.f32 0.0, %v576
    %v578 = vpop.f32.mrf.mxu0
    %579 = vdwg.mxu0
    %v581 = vsel %vm130, %v556, 0
    %v584 = vsel %vm130, %v558, 0
    %586 = vmatpush.bf16.xpose.msra.mxu0 0
    %587 = vmatpush.bf16.xpose.msra.mxu0 0
    %588 = vmatpush.bf16.xpose.msra.mxu0 0
    %589 = vmatpush.bf16.xpose.msra.mxu0 0
    %590 = vmatpush.bf16.xpose.msra.mxu0 0
    %591 = vmatpush.bf16.xpose.msra.mxu0 0
    %592 = vmatpush.bf16.xpose.msra.mxu0 0
    %593 = vmatpush.bf16.xpose.msra.mxu0 %v584
    %594 = vmatmul.bf16.gmra.mxu0 %v581
    %v595 = vpop.f32.mrf.mxu0
    %v596 = vadd.f32 0.0, %v595
    %v597 = vpop.f32.mrf.mxu0
    %598 = vdwg.mxu0
    %v599 = vsel %vm170, %v577, -inf
    %v600 = vsel %vm170, %v596, -inf
    %v601 = vsel %vm130, %v599, -inf
    %602 = vmax.xlane.f32.xlu0 %v601
    %v603 = vpop.xlane.xlu0 %602
    %v604 = vsel %vm130, %v600, -inf
    %605 = vmax.xlane.f32.xlu0 %v604
    %v606 = vpop.xlane.xlu0 %605
    %v607 = vsub.f32 %v599, %v603
    %v608 = vsub.f32 %v600, %v606
    %v609 = vmul.f32 %v607, 1.442695
    %v610 = vpow.pop %v609
    %v611 = vmul.f32 %v608, 1.442695
    %v612 = vpow.pop %v611
    %v613 = vsel %vm130, %v610, 0.0
    %614 = vadd.xlane.f32.xlu0 %v613
    %v615 = vpop.xlane.xlu0 %614
    %v616 = vsel %vm130, %v612, 0.0
    %617 = vadd.xlane.f32.xlu0 %v616
    %v618 = vpop.xlane.xlu0 %617
    %v619 = vrcp.pop %v615
    %v620 = vrcp.pop %v618
    %v621 = vmul.f32 %v610, %v619
    %v622 = vmul.f32 %v612, %v620
    %v623 = vpack.c.bf16 %v621, %v621
    %v624 = vpack.c.bf16 %v622, %v622
    %v626 = vsel %vm130, %v623, 0
    %v629 = vsel %vm200, %v559, 0
    %631 = vmatpush.bf16.msra.mxu0 0
    %632 = vmatpush.bf16.msra.mxu0 0
    %633 = vmatpush.bf16.msra.mxu0 0
    %634 = vmatpush.bf16.msra.mxu0 0
    %635 = vmatpush.bf16.msra.mxu0 0
    %636 = vmatpush.bf16.msra.mxu0 0
    %637 = vmatpush.bf16.msra.mxu0 0
    %638 = vmatpush.bf16.msra.mxu0 %v629
    %639 = vmatmul.bf16.gmra.mxu0 %v626
    %v640 = vpop.f32.mrf.mxu0
    %v641 = vadd.f32 0.0, %v640
    %v642 = vpop.f32.mrf.mxu0
    %643 = vdwg.mxu0
    %v645 = vsel %vm130, %v624, 0
    %v648 = vsel %vm200, %v560, 0
    %650 = vmatpush.bf16.msra.mxu0 0
    %651 = vmatpush.bf16.msra.mxu0 0
    %652 = vmatpush.bf16.msra.mxu0 0
    %653 = vmatpush.bf16.msra.mxu0 0
    %654 = vmatpush.bf16.msra.mxu0 0
    %655 = vmatpush.bf16.msra.mxu0 0
    %656 = vmatpush.bf16.msra.mxu0 0
    %657 = vmatpush.bf16.msra.mxu0 %v648
    %658 = vmatmul.bf16.gmra.mxu0 %v645
    %v659 = vpop.f32.mrf.mxu0
    %v660 = vadd.f32 0.0, %v659
    %v661 = vpop.f32.mrf.mxu0
    %662 = vdwg.mxu0
    %v663 = vpack.c.bf16 %v660, %v641
    %s664 = scalar_lea.vmem %s7, 16
    %v665 = vld [vmem:[%s664] sm:$0xff]
    %v666 = vpack.c.bf16 %v665, %v665
    %v668 = vsel %vm130, %v663, 0
    %v671 = vsel %vm200, %v666, 0
    %673 = vmatpush.bf16.msra.mxu0 0
    %674 = vmatpush.bf16.msra.mxu0 0
    %675 = vmatpush.bf16.msra.mxu0 0
    %676 = vmatpush.bf16.msra.mxu0 0
    %677 = vmatpush.bf16.msra.mxu0 0
    %678 = vmatpush.bf16.msra.mxu0 0
    %679 = vmatpush.bf16.msra.mxu0 0
    %680 = vmatpush.bf16.msra.mxu0 %v671
    %681 = vmatmul.bf16.gmra.mxu0 %v668
    %v682 = vpop.f32.mrf.mxu0
    %v683 = vadd.f32 0.0, %v682
    %v684 = vpop.f32.mrf.mxu0
    %v685 = vadd.f32 0.0, %v684
    %686 = vdwg.mxu0
    %v687 = vadd.f32 %v473, %v683
    %v688 = vadd.f32 %v474, %v685
    %s689 = scalar_lea.vmem %s1, 96
    %v690 = vld [vmem:[%s689] sm:$0xff]
    %v691 = vld [vmem:[%s689 + $0x8] sm:$0xff]
    %v692 = vld [vmem:[%s689 + $0x10] sm:$0xff]
    %v693 = vld [vmem:[%s689 + $0x18] sm:$0xff]
    %v694 = vpack.c.bf16 %v691, %v690
    %v695 = vpack.c.bf16 %v693, %v692
    %s696 = scalar_lea.vmem %s2, 96
    %v697 = vld [vmem:[%s696] sm:$0xff]
    %v698 = vld [vmem:[%s696 + $0x8] sm:$0xff]
    %v699 = vld [vmem:[%s696 + $0x10] sm:$0xff]
    %v700 = vld [vmem:[%s696 + $0x18] sm:$0xff]
    %v701 = vpack.c.bf16 %v698, %v697
    %v702 = vpack.c.bf16 %v700, %v699
    %s703 = scalar_lea.vmem %s3, 96
    %v704 = vld [vmem:[%s703] sm:$0xff]
    %v705 = vld [vmem:[%s703 + $0x8] sm:$0xff]
    %v706 = vld [vmem:[%s703 + $0x10] sm:$0xff]
    %v707 = vld [vmem:[%s703 + $0x18] sm:$0xff]
    %v708 = vpack.c.bf16 %v705, %v704
    %v709 = vpack.c.bf16 %v707, %v706
    %s710 = scalar_lea.vmem %s4, 3
    %v711 = vld [vmem:[%s710] sm:$0x1]
    %v713 = vperm.slane %v711, 0
    %715 = vmatpush.bf16.msra.mxu0 0
    %716 = vmatpush.bf16.msra.mxu0 0
    %717 = vmatpush.bf16.msra.mxu0 0
    %718 = vmatpush.bf16.msra.mxu0 0
    %719 = vmatpush.bf16.msra.mxu0 0
    %720 = vmatpush.bf16.msra.mxu0 0
    %721 = vmatpush.bf16.msra.mxu0 %v695
    %722 = vmatpush.bf16.msra.mxu0 %v694
    %723 = vmatmul.bf16.gmra.mxu0 %v70
    %v724 = vpop.f32.mrf.mxu0
    %v725 = vadd.f32 %v713, %v724
    %v726 = vpop.f32.mrf.mxu0
    %v727 = vadd.f32 %v713, %v726
    %728 = vdwg.mxu0
    %s729 = scalar_lea.vmem %s5, 3
    %v730 = vld [vmem:[%s729] sm:$0x1]
    %v732 = vperm.slane %v730, 0
    %734 = vmatpush.bf16.msra.mxu0 0
    %735 = vmatpush.bf16.msra.mxu0 0
    %736 = vmatpush.bf16.msra.mxu0 0
    %737 = vmatpush.bf16.msra.mxu0 0
    %738 = vmatpush.bf16.msra.mxu0 0
    %739 = vmatpush.bf16.msra.mxu0 0
    %740 = vmatpush.bf16.msra.mxu0 %v702
    %741 = vmatpush.bf16.msra.mxu0 %v701
    %742 = vmatmul.bf16.gmra.mxu0 %v70
    %v743 = vpop.f32.mrf.mxu0
    %v744 = vadd.f32 %v732, %v743
    %v745 = vpop.f32.mrf.mxu0
    %v746 = vadd.f32 %v732, %v745
    %747 = vdwg.mxu0
    %s748 = scalar_lea.vmem %s6, 3
    %v749 = vld [vmem:[%s748] sm:$0x1]
    %v751 = vperm.slane %v749, 0
    %753 = vmatpush.bf16.msra.mxu0 0
    %754 = vmatpush.bf16.msra.mxu0 0
    %755 = vmatpush.bf16.msra.mxu0 0
    %756 = vmatpush.bf16.msra.mxu0 0
    %757 = vmatpush.bf16.msra.mxu0 0
    %758 = vmatpush.bf16.msra.mxu0 0
    %759 = vmatpush.bf16.msra.mxu0 %v709
    %760 = vmatpush.bf16.msra.mxu0 %v708
    %761 = vmatmul.bf16.gmra.mxu0 %v70
    %v762 = vpop.f32.mrf.mxu0
    %v763 = vadd.f32 %v751, %v762
    %v764 = vpop.f32.mrf.mxu0
    %v765 = vadd.f32 %v751, %v764
    %766 = vdwg.mxu0
    %v767 = vmul.f32 %v725, 0.35355338
    %v768 = vmul.f32 %v727, 0.35355338
    %v769 = vpack.c.bf16 %v767, %v767
    %v770 = vpack.c.bf16 %v768, %v768
    %v771 = vpack.c.bf16 %v744, %v744
    %v772 = vpack.c.bf16 %v746, %v746
    %v773 = vpack.c.bf16 %v763, %v763
    %v774 = vpack.c.bf16 %v765, %v765
    %v776 = vsel %vm130, %v769, 0
    %v779 = vsel %vm130, %v771, 0
    %781 = vmatpush.bf16.xpose.msra.mxu0 0
    %782 = vmatpush.bf16.xpose.msra.mxu0 0
    %783 = vmatpush.bf16.xpose.msra.mxu0 0
    %784 = vmatpush.bf16.xpose.msra.mxu0 0
    %785 = vmatpush.bf16.xpose.msra.mxu0 0
    %786 = vmatpush.bf16.xpose.msra.mxu0 0
    %787 = vmatpush.bf16.xpose.msra.mxu0 0
    %788 = vmatpush.bf16.xpose.msra.mxu0 %v779
    %789 = vmatmul.bf16.gmra.mxu0 %v776
    %v790 = vpop.f32.mrf.mxu0
    %v791 = vadd.f32 0.0, %v790
    %v792 = vpop.f32.mrf.mxu0
    %793 = vdwg.mxu0
    %v795 = vsel %vm130, %v770, 0
    %v798 = vsel %vm130, %v772, 0
    %800 = vmatpush.bf16.xpose.msra.mxu0 0
    %801 = vmatpush.bf16.xpose.msra.mxu0 0
    %802 = vmatpush.bf16.xpose.msra.mxu0 0
    %803 = vmatpush.bf16.xpose.msra.mxu0 0
    %804 = vmatpush.bf16.xpose.msra.mxu0 0
    %805 = vmatpush.bf16.xpose.msra.mxu0 0
    %806 = vmatpush.bf16.xpose.msra.mxu0 0
    %807 = vmatpush.bf16.xpose.msra.mxu0 %v798
    %808 = vmatmul.bf16.gmra.mxu0 %v795
    %v809 = vpop.f32.mrf.mxu0
    %v810 = vadd.f32 0.0, %v809
    %v811 = vpop.f32.mrf.mxu0
    %812 = vdwg.mxu0
    %v813 = vsel %vm170, %v791, -inf
    %v814 = vsel %vm170, %v810, -inf
    %v815 = vsel %vm130, %v813, -inf
    %816 = vmax.xlane.f32.xlu0 %v815
    %v817 = vpop.xlane.xlu0 %816
    %v818 = vsel %vm130, %v814, -inf
    %819 = vmax.xlane.f32.xlu0 %v818
    %v820 = vpop.xlane.xlu0 %819
    %v821 = vsub.f32 %v813, %v817
    %v822 = vsub.f32 %v814, %v820
    %v823 = vmul.f32 %v821, 1.442695
    %v824 = vpow.pop %v823
    %v825 = vmul.f32 %v822, 1.442695
    %v826 = vpow.pop %v825
    %v827 = vsel %vm130, %v824, 0.0
    %828 = vadd.xlane.f32.xlu0 %v827
    %v829 = vpop.xlane.xlu0 %828
    %v830 = vsel %vm130, %v826, 0.0
    %831 = vadd.xlane.f32.xlu0 %v830
    %v832 = vpop.xlane.xlu0 %831
    %v833 = vrcp.pop %v829
    %v834 = vrcp.pop %v832
    %v835 = vmul.f32 %v824, %v833
    %v836 = vmul.f32 %v826, %v834
    %v837 = vpack.c.bf16 %v835, %v835
    %v838 = vpack.c.bf16 %v836, %v836
    %v840 = vsel %vm130, %v837, 0
    %v843 = vsel %vm200, %v773, 0
    %845 = vmatpush.bf16.msra.mxu0 0
    %846 = vmatpush.bf16.msra.mxu0 0
    %847 = vmatpush.bf16.msra.mxu0 0
    %848 = vmatpush.bf16.msra.mxu0 0
    %849 = vmatpush.bf16.msra.mxu0 0
    %850 = vmatpush.bf16.msra.mxu0 0
    %851 = vmatpush.bf16.msra.mxu0 0
    %852 = vmatpush.bf16.msra.mxu0 %v843
    %853 = vmatmul.bf16.gmra.mxu0 %v840
    %v854 = vpop.f32.mrf.mxu0
    %v855 = vadd.f32 0.0, %v854
    %v856 = vpop.f32.mrf.mxu0
    %857 = vdwg.mxu0
    %v859 = vsel %vm130, %v838, 0
    %v862 = vsel %vm200, %v774, 0
    %864 = vmatpush.bf16.msra.mxu0 0
    %865 = vmatpush.bf16.msra.mxu0 0
    %866 = vmatpush.bf16.msra.mxu0 0
    %867 = vmatpush.bf16.msra.mxu0 0
    %868 = vmatpush.bf16.msra.mxu0 0
    %869 = vmatpush.bf16.msra.mxu0 0
    %870 = vmatpush.bf16.msra.mxu0 0
    %871 = vmatpush.bf16.msra.mxu0 %v862
    %872 = vmatmul.bf16.gmra.mxu0 %v859
    %v873 = vpop.f32.mrf.mxu0
    %v874 = vadd.f32 0.0, %v873
    %v875 = vpop.f32.mrf.mxu0
    %876 = vdwg.mxu0
    %v877 = vpack.c.bf16 %v874, %v855
    %s878 = scalar_lea.vmem %s7, 24
    %v879 = vld [vmem:[%s878] sm:$0xff]
    %v880 = vpack.c.bf16 %v879, %v879
    %v882 = vsel %vm130, %v877, 0
    %v885 = vsel %vm200, %v880, 0
    %887 = vmatpush.bf16.msra.mxu0 0
    %888 = vmatpush.bf16.msra.mxu0 0
    %889 = vmatpush.bf16.msra.mxu0 0
    %890 = vmatpush.bf16.msra.mxu0 0
    %891 = vmatpush.bf16.msra.mxu0 0
    %892 = vmatpush.bf16.msra.mxu0 0
    %893 = vmatpush.bf16.msra.mxu0 0
    %894 = vmatpush.bf16.msra.mxu0 %v885
    %895 = vmatmul.bf16.gmra.mxu0 %v882
    %v896 = vpop.f32.mrf.mxu0
    %v897 = vadd.f32 0.0, %v896
    %v898 = vpop.f32.mrf.mxu0
    %v899 = vadd.f32 0.0, %v898
    %900 = vdwg.mxu0
    %v901 = vadd.f32 %v687, %v897
    %v902 = vadd.f32 %v688, %v899
    %903 = vst.msk [vmem:[#allocation2] sm:$0xff] %vm68, %v901
    %904 = vst.msk [vmem:[#allocation2 + $0x8] sm:$0xff] %vm68, %v902
    // Predicated region
    $region38: #{causal_self_attention.1} parent=1 // pred_check
      _
    $region39: #{causal_self_attention.1} parent=1 // pred_check_branch
      %906 = sbr.rel (0) target = $region41
    $region40: #{causal_self_attention.1} parent=1 // pred_region
      %908 = vsyncadd [#allocation3], 0
      %s909 = sshll.u32 [#allocation2], 4
      %s910 = int_to_ptr.vmem [resolvable:$true] %s909
      %s911 = sshll.u32 %s9, 4
      %s912 = int_to_ptr.hbm [resolvable:$true] %s911
      %917 = dma.vmem_to_hbm [thread:$0]  %s910, 256, %s912, [#allocation3], 128, 128, 8
    $region41: #{causal_self_attention.1} parent=1 // pred_fallthru
      _
    // Predicated region
    $region42: #{causal_self_attention.1} parent=1 // pred_check
      _
    $region43: #{causal_self_attention.1} parent=1 // pred_check_branch
      %919 = sbr.rel (0) target = $region45
    $region44: #{causal_self_attention.1} parent=1 // pred_region
      %921 = dma.done [#allocation3], 256
    $region45: #{causal_self_attention.1} parent=1 // pred_fallthru
      _
    %922 = vsyncpa [#allocation3], 1

</llo_original>
